<compile_context>
chip_gen: v6e
topology: v6e:2x2x1
jax: 0.10.0
libtpu: 0.0.40
codegen_flags: <defaults>
</compile_context>

<pallas_src>
import functools

import jax
import jax.numpy as jnp
from jax.experimental import pallas as pl
from jax.experimental.pallas import tpu as pltpu

_LANE = 128          # TPU lane width; hidden & class dims padded to a multiple of this
_SUBLANE = 8         # sublane granularity for the batch tile
_NEG_BIG = -1.0e30   # bias for padded class lanes -> exp underflows to 0 in softmax
_MAX_BATCH_TILE = 1024


def _mlp_kernel(x_ref, w1t_ref, b1_ref, w2t_ref, b2_ref, o_ref):
    # fc1: (TB, D) @ (D, HP) + (1, HP), ReLU.  Padded hidden columns are zero.
    h = jnp.dot(x_ref[...], w1t_ref[...], preferred_element_type=jnp.float32)
    h = jnp.maximum(h + b1_ref[...], 0.0)
    # fc2 on class-padded weights: (TB, HP) @ (HP, CP) + (1, CP).
    # Padded hidden rows of w2t are zero; padded class lanes get -1e30 bias so their
    # softmax contribution is exactly 0.
    logits = jnp.dot(h, w2t_ref[...], preferred_element_type=jnp.float32) + b2_ref[...]
    # softmax over the class axis (module in eval mode)
    m = jnp.max(logits, axis=1, keepdims=True)
    e = jnp.exp(logits - m)
    denom = jnp.sum(e, axis=1, keepdims=True)
    o_ref[...] = (e * pl.reciprocal(denom, approx=False)).astype(o_ref.dtype)


def prepare_params(w1, b1, w2, b2):
    """One-time parameter prep (model-load time, NOT the per-call forward path).

    w1: (H, D), b1: (H,)  -- PyTorch nn.Linear(input_size, hidden_size) layout
    w2: (C, H), b2: (C,)  -- PyTorch nn.Linear(hidden_size, num_classes) layout

    Returns ((w1t, b1r, w2t, b2r), num_classes) with:
      w1t (D, HP)   transposed, hidden dim zero-padded to a multiple of 128
      b1r (1, HP)   zero-padded
      w2t (HP, CP)  transposed, hidden rows zero-padded, class dim zero-padded
      b2r (1, CP)   padded class lanes set to -1e30
    """
    w1 = jnp.asarray(w1, jnp.float32)
    b1 = jnp.asarray(b1, jnp.float32)
    w2 = jnp.asarray(w2, jnp.float32)
    b2 = jnp.asarray(b2, jnp.float32)

    H, D = w1.shape
    C, H2 = w2.shape
    assert H == H2, "fc1 output dim must match fc2 input dim"
    HP = pl.cdiv(H, _LANE) * _LANE
    CP = pl.cdiv(C, _LANE) * _LANE

    w1t = jnp.zeros((D, HP), jnp.float32).at[:, :H].set(w1.T)
    b1r = jnp.zeros((1, HP), jnp.float32).at[0, :H].set(b1)
    w2t = jnp.zeros((HP, CP), jnp.float32).at[:H, :C].set(w2.T)
    b2r = jnp.full((1, CP), _NEG_BIG, jnp.float32).at[0, :C].set(b2)
    return (w1t, b1r, w2t, b2r), C


@functools.lru_cache(maxsize=None)
def _tensorcores_per_chip():
    """v7x has 2 TensorCores per chip that dimension_semantics 'parallel' can shard
    across; v5e/v6e have 1 (extra grid steps there are pure overhead)."""
    try:
        kind = jax.devices()[0].device_kind.lower()
    except Exception:
        return 1
    return 2 if "v7" in kind else 1


@functools.partial(
    jax.jit, static_argnames=("num_classes", "max_batch_tile", "min_steps", "full_output")
)
def baseline_model_forward(x, params, *, num_classes, max_batch_tile=_MAX_BATCH_TILE,
                           min_steps=None, full_output=False):
    """Forward pass of BaselineModel in eval mode.

    Returns (B, num_classes) softmax probs, or the class-padded (B, 128-multiple)
    array when full_output=True (padded lanes are exactly 0 probability), which
    skips the post-kernel slice / extra HBM pass.
    """
    w1t, b1r, w2t, b2r = params
    x = jnp.asarray(x, jnp.float32)
    B, D = x.shape
    HP = w1t.shape[1]
    CP = w2t.shape[1]

    if min_steps is None:
        min_steps = _tensorcores_per_chip()

    # Batch tile: as large as possible (up to 1024) while leaving >= min_steps grid
    # steps for megacore sharding; multiple of 8 (sublane rule). No explicit padding
    # of x: Pallas masks the partial last block; garbage rows only land in output
    # rows that are masked off / never returned.
    B8 = pl.cdiv(B, _SUBLANE) * _SUBLANE
    tb = min(max_batch_tile, pl.cdiv(B8, min_steps))
    TB = pl.cdiv(tb, _SUBLANE) * _SUBLANE
    nb = pl.cdiv(B, TB)

    cost = pl.CostEstimate(
        flops=2 * B * (D * HP + HP * CP),
        transcendentals=B * CP,
        bytes_accessed=4 * (B * D + B * CP + D * HP + HP * CP),
    )

    out = pl.pallas_call(
        _mlp_kernel,
        out_shape=jax.ShapeDtypeStruct((B, CP), jnp.float32),
        grid=(nb,),
        in_specs=[
            pl.BlockSpec((TB, D), lambda i: (i, 0)),    # x: tiled over batch (double-buffered)
            pl.BlockSpec((D, HP), lambda i: (0, 0)),    # w1t: VMEM-resident
            pl.BlockSpec((1, HP), lambda i: (0, 0)),    # b1
            pl.BlockSpec((HP, CP), lambda i: (0, 0)),   # w2t (hidden+class padded)
            pl.BlockSpec((1, CP), lambda i: (0, 0)),    # b2 (class padded)
        ],
        out_specs=pl.BlockSpec((TB, CP), lambda i: (i, 0)),
        compiler_params=pltpu.CompilerParams(dimension_semantics=("parallel",)),
        cost_estimate=cost,
    )(x, w1t, b1r, w2t, b2r)

    if full_output:
        return out
    return out[:, :num_classes]


def _reference_forward(x, w1, b1, w2, b2):
    h = jnp.maximum(x @ w1.T + b1, 0.0)
    logits = h @ w2.T + b2
    return jax.nn.softmax(logits, axis=1)


if __name__ == "__main__":
    # Shapes consistent with the module: input_size=64, hidden_size=32, num_classes=10.
    B, D, H, C = 256, 64, 32, 10
    key = jax.random.PRNGKey(0)
    kx, k1, kb1, k2, kb2 = jax.random.split(key, 5)

    x = jax.random.normal(kx, (B, D), dtype=jnp.float32)
    # Deterministic parameter init (uniform, PyTorch-like fan_in scaling)
    bound1 = 1.0 / (D ** 0.5)
    w1 = jax.random.uniform(k1, (H, D), jnp.float32, -bound1, bound1)
    b1 = jax.random.uniform(kb1, (H,), jnp.float32, -bound1, bound1)
    bound2 = 1.0 / (H ** 0.5)
    w2 = jax.random.uniform(k2, (C, H), jnp.float32, -bound2, bound2)
    b2 = jax.random.uniform(kb2, (C,), jnp.float32, -bound2, bound2)

    params, num_classes = prepare_params(w1, b1, w2, b2)   # one-time prep

    # Full-batch case (single grid step on v5e/v6e, 2 parallel steps on v7x).
    out = baseline_model_forward(x, params, num_classes=num_classes)
    out = jax.block_until_ready(out)
    ref = _reference_forward(x, w1, b1, w2, b2)
    assert out.shape == (B, C)
    assert jnp.allclose(out, ref, atol=1e-5, rtol=1e-5), "mismatch vs reference"

    # Ragged batch (exercises the no-pad partial-last-block path).
    Br = 250
    out_r = baseline_model_forward(x[:Br], params, num_classes=num_classes)
    out_r = jax.block_until_ready(out_r)
    assert out_r.shape == (Br, C)
    assert jnp.allclose(out_r, ref[:Br], atol=1e-5, rtol=1e-5), "ragged mismatch vs reference"

    print("KERNEL_OK")
</pallas_src>

<mosaic_0001>
module attributes {stable_mosaic.version = 11 : i64} {
  func.func @_mlp_kernel(%arg0: i32, %arg1: memref<256x64xf32, #tpu.memory_space<vmem>>, %arg2: memref<64x128xf32, #tpu.memory_space<vmem>>, %arg3: memref<1x128xf32, #tpu.memory_space<vmem>>, %arg4: memref<128x128xf32, #tpu.memory_space<vmem>>, %arg5: memref<1x128xf32, #tpu.memory_space<vmem>>, %arg6: memref<256x128xf32, #tpu.memory_space<vmem>>) attributes {dimension_semantics = [#tpu.dimension_semantics<parallel>], iteration_bounds = array<i64: 1>, scalar_prefetch = 0 : i64, scratch_operands = 0 : i64, tpu.core_type = #tpu.core_type<tc>, window_params = [{transform_indices = @transform_0, window_bounds = array<i64: 256, 64>}, {pipeline_mode = #tpu.pipeline_mode<synchronous>, transform_indices = @transform_1, window_bounds = array<i64: 64, 128>}, {pipeline_mode = #tpu.pipeline_mode<synchronous>, transform_indices = @transform_2, window_bounds = array<i64: 1, 128>}, {pipeline_mode = #tpu.pipeline_mode<synchronous>, transform_indices = @transform_3, window_bounds = array<i64: 128, 128>}, {pipeline_mode = #tpu.pipeline_mode<synchronous>, transform_indices = @transform_4, window_bounds = array<i64: 1, 128>}, {transform_indices = @transform_5, window_bounds = array<i64: 256, 128>}]} {
    %c0 = arith.constant 0 : index
    %c0_0 = arith.constant 0 : index
    %0 = vector.load %arg1[%c0, %c0_0] : memref<256x64xf32, #tpu.memory_space<vmem>>, vector<256x64xf32>
    %c0_1 = arith.constant 0 : index
    %c0_2 = arith.constant 0 : index
    %1 = vector.load %arg2[%c0_1, %c0_2] : memref<64x128xf32, #tpu.memory_space<vmem>>, vector<64x128xf32>
    %cst = arith.constant dense<0.000000e+00> : vector<256x128xf32>
    %2 = tpu.matmul %0, %1, %cst {dimension_numbers = #tpu.dot_dimension_numbers<[1], [0], [0], [1], [0, 0, 1, 1], [], []>} : vector<256x64xf32>, vector<64x128xf32>, vector<256x128xf32> -> vector<256x128xf32>
    %c0_3 = arith.constant 0 : index
    %c0_4 = arith.constant 0 : index
    %3 = vector.load %arg3[%c0_3, %c0_4] : memref<1x128xf32, #tpu.memory_space<vmem>>, vector<1x128xf32>
    %4 = vector.broadcast %3 : vector<1x128xf32> to vector<256x128xf32>
    %5 = arith.addf %2, %4 : vector<256x128xf32>
    %cst_5 = arith.constant 0.000000e+00 : f32
    %6 = vector.broadcast %cst_5 : f32 to vector<256x128xf32>
    %7 = arith.maximumf %5, %6 : vector<256x128xf32>
    %c0_6 = arith.constant 0 : index
    %c0_7 = arith.constant 0 : index
    %8 = vector.load %arg4[%c0_6, %c0_7] : memref<128x128xf32, #tpu.memory_space<vmem>>, vector<128x128xf32>
    %cst_8 = arith.constant dense<0.000000e+00> : vector<256x128xf32>
    %9 = tpu.matmul %7, %8, %cst_8 {dimension_numbers = #tpu.dot_dimension_numbers<[1], [0], [0], [1], [0, 0, 1, 1], [], []>} : vector<256x128xf32>, vector<128x128xf32>, vector<256x128xf32> -> vector<256x128xf32>
    %c0_9 = arith.constant 0 : index
    %c0_10 = arith.constant 0 : index
    %10 = vector.load %arg5[%c0_9, %c0_10] : memref<1x128xf32, #tpu.memory_space<vmem>>, vector<1x128xf32>
    %11 = vector.broadcast %10 : vector<1x128xf32> to vector<256x128xf32>
    %12 = arith.addf %9, %11 : vector<256x128xf32>
    %cst_11 = arith.constant dense<0xFF800000> : vector<256xf32>
    %13 = vector.multi_reduction <maximumf>, %12, %cst_11 [1] : vector<256x128xf32> to vector<256xf32>
    %14 = vector.shape_cast %13 : vector<256xf32> to vector<256x1xf32>
    %15 = vector.broadcast %14 : vector<256x1xf32> to vector<256x128xf32>
    %16 = arith.subf %12, %15 : vector<256x128xf32>
    %17 = math.exp %16 : vector<256x128xf32>
    %cst_12 = arith.constant dense<0.000000e+00> : vector<256xf32>
    %18 = vector.multi_reduction <add>, %17, %cst_12 [1] : vector<256x128xf32> to vector<256xf32>
    %19 = vector.shape_cast %18 : vector<256xf32> to vector<256x1xf32>
    %20 = tpu.reciprocal %19 : vector<256x1xf32> -> vector<256x1xf32>
    %21 = vector.broadcast %20 : vector<256x1xf32> to vector<256x128xf32>
    %22 = arith.mulf %17, %21 : vector<256x128xf32>
    %c0_13 = arith.constant 0 : index
    %c0_14 = arith.constant 0 : index
    %23 = vector.load %arg6[%c0_13, %c0_14] : memref<256x128xf32, #tpu.memory_space<vmem>>, vector<256x128xf32>
    tpu.vector_store %arg6[%c0_13, %c0_14], %22 {strides = array<i32>} : memref<256x128xf32, #tpu.memory_space<vmem>>, vector<256x128xf32>,
    return
  }
  func.func @transform_0(%arg0: i32) -> (i32, i32) {
    %c0_i32 = arith.constant 0 : i32
    %c0_i32_0 = arith.constant 0 : i32
    return %arg0, %c0_i32 : i32, i32
  }
  func.func @transform_1(%arg0: i32) -> (i32, i32) {
    %c0_i32 = arith.constant 0 : i32
    %c0_i32_0 = arith.constant 0 : i32
    %c0_i32_1 = arith.constant 0 : i32
    return %c0_i32, %c0_i32_0 : i32, i32
  }
  func.func @transform_2(%arg0: i32) -> (i32, i32) {
    %c0_i32 = arith.constant 0 : i32
    %c0_i32_0 = arith.constant 0 : i32
    %c0_i32_1 = arith.constant 0 : i32
    return %c0_i32, %c0_i32_0 : i32, i32
  }
  func.func @transform_3(%arg0: i32) -> (i32, i32) {
    %c0_i32 = arith.constant 0 : i32
    %c0_i32_0 = arith.constant 0 : i32
    %c0_i32_1 = arith.constant 0 : i32
    return %c0_i32, %c0_i32_0 : i32, i32
  }
  func.func @transform_4(%arg0: i32) -> (i32, i32) {
    %c0_i32 = arith.constant 0 : i32
    %c0_i32_0 = arith.constant 0 : i32
    %c0_i32_1 = arith.constant 0 : i32
    return %c0_i32, %c0_i32_0 : i32, i32
  }
  func.func @transform_5(%arg0: i32) -> (i32, i32) {
    %c0_i32 = arith.constant 0 : i32
    %c0_i32_0 = arith.constant 0 : i32
    return %arg0, %c0_i32 : i32, i32
  }
}

</mosaic_0001>

<llo_original>
// kernel: baseline_model_forward.1
$region0: #{baseline_model_forward.1}
  #allocation0 [shape = 'u32[]', space=smem, size = 0x4, offset = 0x4, fixed_abs, tag = 'smem constant byte address 0x4 - core index']
  #allocation1 [shape = 'u32[144,128]{1,0:T(1,128)}', space=vmem, size = 0x12000, scoped, tag = 'internal scratch']
  %s0 = inlined_call_operand.vmem [shape: f32[256,64], index: 0, kind: input, shape index: {}]
  %s1 = inlined_call_operand.vmem [shape: f32[64,128], index: 1, kind: input, shape index: {}]
  %s2 = inlined_call_operand.vmem [shape: f32[1,128], index: 2, kind: input, shape index: {}]
  %s3 = inlined_call_operand.vmem [shape: f32[128,128], index: 3, kind: input, shape index: {}]
  %s4 = inlined_call_operand.vmem [shape: f32[1,128], index: 4, kind: input, shape index: {}]
  %s5 = inlined_call_operand.vmem [shape: f32[256,128], index: 5, kind: output, shape index: {}]
  %s6 = sld [smem:[#allocation0]]
  $region30: #{baseline_model_forward.1} parent=0
    _
  %s8 = ssub.s32 1, %s6
  %s9 = scalar_select 0, %s8, %s6
  // Predicated region
  $region2: #{baseline_model_forward.1} parent=0 // pred_check
    _
  $region3: #{baseline_model_forward.1} parent=0 // pred_check_branch
    %11 = sbr.rel (0) target = $region5
  $region4: #{baseline_model_forward.1} parent=0 // pred_region
    _
  $region5: #{baseline_model_forward.1} parent=0 // pred_fallthru
    _
  // Predicated region
  $region6: #{baseline_model_forward.1} parent=0 // pred_check
    _
  $region7: #{baseline_model_forward.1} parent=0 // pred_check_branch
    %13 = sbr.rel (0) target = $region9
  $region8: #{baseline_model_forward.1} parent=0 // pred_region
    _
  $region9: #{baseline_model_forward.1} parent=0 // pred_fallthru
    _
  // Predicated region
  $region10: #{baseline_model_forward.1} parent=0 // pred_check
    _
  $region11: #{baseline_model_forward.1} parent=0 // pred_check_branch
    %15 = sbr.rel (0) target = $region13
  $region12: #{baseline_model_forward.1} parent=0 // pred_region
    _
  $region13: #{baseline_model_forward.1} parent=0 // pred_fallthru
    _
  // Predicated region
  $region14: #{baseline_model_forward.1} parent=0 // pred_check
    _
  $region15: #{baseline_model_forward.1} parent=0 // pred_check_branch
    %17 = sbr.rel (0) target = $region17
  $region16: #{baseline_model_forward.1} parent=0 // pred_region
    _
  $region17: #{baseline_model_forward.1} parent=0 // pred_fallthru
    _
  // Predicated region
  $region18: #{baseline_model_forward.1} parent=0 // pred_check
    _
  $region19: #{baseline_model_forward.1} parent=0 // pred_check_branch
    %19 = sbr.rel (0) target = $region21
  $region20: #{baseline_model_forward.1} parent=0 // pred_region
    _
  $region21: #{baseline_model_forward.1} parent=0 // pred_fallthru
    _
  %v20 = vld [vmem:[%s0] sm:$0xff]
  %v21 = vld [vmem:[%s0 + $0x8] sm:$0xff]
  %v22 = vld [vmem:[%s0 + $0x10] sm:$0xff]
  %v23 = vld [vmem:[%s0 + $0x18] sm:$0xff]
  %v24 = vld [vmem:[%s0 + $0x20] sm:$0xff]
  %v25 = vld [vmem:[%s0 + $0x28] sm:$0xff]
  %v26 = vld [vmem:[%s0 + $0x30] sm:$0xff]
  %v27 = vld [vmem:[%s0 + $0x38] sm:$0xff]
  %v28 = vld [vmem:[%s0 + $0x40] sm:$0xff]
  %v29 = vld [vmem:[%s0 + $0x48] sm:$0xff]
  %v30 = vld [vmem:[%s0 + $0x50] sm:$0xff]
  %v31 = vld [vmem:[%s0 + $0x58] sm:$0xff]
  %v32 = vld [vmem:[%s0 + $0x60] sm:$0xff]
  %v33 = vld [vmem:[%s0 + $0x68] sm:$0xff]
  %v34 = vld [vmem:[%s0 + $0x70] sm:$0xff]
  %v35 = vld [vmem:[%s0 + $0x78] sm:$0xff]
  %v36 = vld [vmem:[%s0 + $0x80] sm:$0xff]
  %v37 = vld [vmem:[%s0 + $0x88] sm:$0xff]
  %v38 = vld [vmem:[%s0 + $0x90] sm:$0xff]
  %v39 = vld [vmem:[%s0 + $0x98] sm:$0xff]
  %v40 = vld [vmem:[%s0 + $0xa0] sm:$0xff]
  %v41 = vld [vmem:[%s0 + $0xa8] sm:$0xff]
  %v42 = vld [vmem:[%s0 + $0xb0] sm:$0xff]
  %v43 = vld [vmem:[%s0 + $0xb8] sm:$0xff]
  %v44 = vld [vmem:[%s0 + $0xc0] sm:$0xff]
  %v45 = vld [vmem:[%s0 + $0xc8] sm:$0xff]
  %v46 = vld [vmem:[%s0 + $0xd0] sm:$0xff]
  %v47 = vld [vmem:[%s0 + $0xd8] sm:$0xff]
  %v48 = vld [vmem:[%s0 + $0xe0] sm:$0xff]
  %v49 = vld [vmem:[%s0 + $0xe8] sm:$0xff]
  %v50 = vld [vmem:[%s0 + $0xf0] sm:$0xff]
  %v51 = vld [vmem:[%s0 + $0xf8] sm:$0xff]
  %v52 = vld [vmem:[%s1] sm:$0xff]
  %v53 = vld [vmem:[%s1 + $0x8] sm:$0xff]
  %v54 = vld [vmem:[%s1 + $0x10] sm:$0xff]
  %v55 = vld [vmem:[%s1 + $0x18] sm:$0xff]
  %v56 = vld [vmem:[%s1 + $0x20] sm:$0xff]
  %v57 = vld [vmem:[%s1 + $0x28] sm:$0xff]
  %v58 = vld [vmem:[%s1 + $0x30] sm:$0xff]
  %v59 = vld [vmem:[%s1 + $0x38] sm:$0xff]
  %v60 = vld [vmem:[%s2] sm:$0x1]
  %v62 = vlaneseq
  %v63 = vshrl.u32 %v62, 7
  %v64 = vsub.s32 0, %v63
  %v65 = vrot.slane %v60, %v64
  %vm67 = vcmask 523264
  %v69 = vsel %vm67, %v20, 0
  %v72 = vsel %vm67, %v21, 0
  %v75 = vsel %vm67, %v22, 0
  %v78 = vsel %vm67, %v23, 0
  %v81 = vsel %vm67, %v24, 0
  %v84 = vsel %vm67, %v25, 0
  %v87 = vsel %vm67, %v26, 0
  %v90 = vsel %vm67, %v27, 0
  %v93 = vsel %vm67, %v28, 0
  %v96 = vsel %vm67, %v29, 0
  %v99 = vsel %vm67, %v30, 0
  %v102 = vsel %vm67, %v31, 0
  %v105 = vsel %vm67, %v32, 0
  %v108 = vsel %vm67, %v33, 0
  %v111 = vsel %vm67, %v34, 0
  %v114 = vsel %vm67, %v35, 0
  %v117 = vsel %vm67, %v36, 0
  %v120 = vsel %vm67, %v37, 0
  %v123 = vsel %vm67, %v38, 0
  %v126 = vsel %vm67, %v39, 0
  %v129 = vsel %vm67, %v40, 0
  %v132 = vsel %vm67, %v41, 0
  %v135 = vsel %vm67, %v42, 0
  %v138 = vsel %vm67, %v43, 0
  %v141 = vsel %vm67, %v44, 0
  %v144 = vsel %vm67, %v45, 0
  %v147 = vsel %vm67, %v46, 0
  %v150 = vsel %vm67, %v47, 0
  %v153 = vsel %vm67, %v48, 0
  %v156 = vsel %vm67, %v49, 0
  %v159 = vsel %vm67, %v50, 0
  %v162 = vsel %vm67, %v51, 0
  %164 = vmatprep.subr.mxu0 0.0
  %165 = vmatpush1.msra.mxu0 0.0
  %166 = vmatprep.subr.mxu0 0.0
  %167 = vmatpush1.msra.mxu0 0.0
  %168 = vmatprep.subr.mxu0 0.0
  %169 = vmatpush1.msra.mxu0 0.0
  %170 = vmatprep.subr.mxu0 0.0
  %171 = vmatpush1.msra.mxu0 0.0
  %172 = vmatprep.subr.mxu0 0.0
  %173 = vmatpush1.msra.mxu0 0.0
  %174 = vmatprep.subr.mxu0 0.0
  %175 = vmatpush1.msra.mxu0 0.0
  %176 = vmatprep.subr.mxu0 0.0
  %177 = vmatpush1.msra.mxu0 0.0
  %178 = vmatprep.subr.mxu0 0.0
  %179 = vmatpush1.msra.mxu0 0.0
  %180 = vmatprep.subr.mxu0 0.0
  %181 = vmatpush1.msra.mxu0 %v59
  %182 = vmatprep.subr.mxu0 0.0
  %183 = vmatpush1.msra.mxu0 %v58
  %184 = vmatprep.subr.mxu0 0.0
  %185 = vmatpush1.msra.mxu0 %v57
  %186 = vmatprep.subr.mxu0 0.0
  %187 = vmatpush1.msra.mxu0 %v56
  %188 = vmatprep.subr.mxu0 0.0
  %189 = vmatpush1.msra.mxu0 %v55
  %190 = vmatprep.subr.mxu0 0.0
  %191 = vmatpush1.msra.mxu0 %v54
  %192 = vmatprep.subr.mxu0 0.0
  %193 = vmatpush1.msra.mxu0 %v53
  %194 = vmatprep.subr.mxu0 0.0
  %195 = vmatpush1.msra.mxu0 %v52
  %196 = vmatprep.subr.mxu0 0.0
  %197 = vmatpush2.msra.mxu0 0.0
  %198 = vmatprep.subr.mxu0 0.0
  %199 = vmatpush2.msra.mxu0 0.0
  %200 = vmatprep.subr.mxu0 0.0
  %201 = vmatpush2.msra.mxu0 0.0
  %202 = vmatprep.subr.mxu0 0.0
  %203 = vmatpush2.msra.mxu0 0.0
  %204 = vmatprep.subr.mxu0 0.0
  %205 = vmatpush2.msra.mxu0 0.0
  %206 = vmatprep.subr.mxu0 0.0
  %207 = vmatpush2.msra.mxu0 0.0
  %208 = vmatprep.subr.mxu0 0.0
  %209 = vmatpush2.msra.mxu0 0.0
  %210 = vmatprep.subr.mxu0 0.0
  %211 = vmatpush2.msra.mxu0 0.0
  %212 = vmatprep.subr.mxu0 0.0
  %213 = vmatpush2.msra.mxu0 0.0
  %214 = vmatprep.subr.mxu0 0.0
  %215 = vmatpush2.msra.mxu0 0.0
  %216 = vmatprep.subr.mxu0 0.0
  %217 = vmatpush2.msra.mxu0 0.0
  %218 = vmatprep.subr.mxu0 0.0
  %219 = vmatpush2.msra.mxu0 0.0
  %220 = vmatprep.subr.mxu0 0.0
  %221 = vmatpush2.msra.mxu0 0.0
  %222 = vmatprep.subr.mxu0 0.0
  %223 = vmatpush2.msra.mxu0 0.0
  %224 = vmatprep.subr.mxu0 0.0
  %225 = vmatpush2.msra.mxu0 0.0
  %226 = vmatprep.subr.mxu0 0.0
  %227 = vmatpush2.msra.mxu0 0.0
  %228 = vmatprep.mubr.f32.mxu0 0.0
  %229 = vmatmul.mubr.f32.gmra.mxu0 %v69
  %v230 = vpop.f32.mrf.mxu0
  %v231 = vadd.f32 %v65, %v230
  %v232 = vpop.f32.mrf.mxu0
  %233 = vmatprep.mubr.f32.mxu0 0.0
  %234 = vmatmul.mubr.f32.gmra.mxu0 %v72
  %v235 = vpop.f32.mrf.mxu0
  %v236 = vadd.f32 %v65, %v235
  %v237 = vpop.f32.mrf.mxu0
  %238 = vmatprep.mubr.f32.mxu0 0.0
  %239 = vmatmul.mubr.f32.gmra.mxu0 %v75
  %v240 = vpop.f32.mrf.mxu0
  %v241 = vadd.f32 %v65, %v240
  %v242 = vpop.f32.mrf.mxu0
  %243 = vmatprep.mubr.f32.mxu0 0.0
  %244 = vmatmul.mubr.f32.gmra.mxu0 %v78
  %v245 = vpop.f32.mrf.mxu0
  %v246 = vadd.f32 %v65, %v245
  %v247 = vpop.f32.mrf.mxu0
  %248 = vmatprep.mubr.f32.mxu0 0.0
  %249 = vmatmul.mubr.f32.gmra.mxu0 %v81
  %v250 = vpop.f32.mrf.mxu0
  %v251 = vadd.f32 %v65, %v250
  %v252 = vpop.f32.mrf.mxu0
  %253 = vmatprep.mubr.f32.mxu0 0.0
  %254 = vmatmul.mubr.f32.gmra.mxu0 %v84
  %v255 = vpop.f32.mrf.mxu0
  %v256 = vadd.f32 %v65, %v255
  %v257 = vpop.f32.mrf.mxu0
  %258 = vmatprep.mubr.f32.mxu0 0.0
  %259 = vmatmul.mubr.f32.gmra.mxu0 %v87
  %v260 = vpop.f32.mrf.mxu0
  %v261 = vadd.f32 %v65, %v260
  %v262 = vpop.f32.mrf.mxu0
  %263 = vmatprep.mubr.f32.mxu0 0.0
  %264 = vmatmul.mubr.f32.gmra.mxu0 %v90
  %v265 = vpop.f32.mrf.mxu0
  %v266 = vadd.f32 %v65, %v265
  %v267 = vpop.f32.mrf.mxu0
  %268 = vmatprep.mubr.f32.mxu0 0.0
  %269 = vmatmul.mubr.f32.gmra.mxu0 %v93
  %v270 = vpop.f32.mrf.mxu0
  %v271 = vadd.f32 %v65, %v270
  %v272 = vpop.f32.mrf.mxu0
  %273 = vmatprep.mubr.f32.mxu0 0.0
  %274 = vmatmul.mubr.f32.gmra.mxu0 %v96
  %v275 = vpop.f32.mrf.mxu0
  %v276 = vadd.f32 %v65, %v275
  %v277 = vpop.f32.mrf.mxu0
  %278 = vmatprep.mubr.f32.mxu0 0.0
  %279 = vmatmul.mubr.f32.gmra.mxu0 %v99
  %v280 = vpop.f32.mrf.mxu0
  %v281 = vadd.f32 %v65, %v280
  %v282 = vpop.f32.mrf.mxu0
  %283 = vmatprep.mubr.f32.mxu0 0.0
  %284 = vmatmul.mubr.f32.gmra.mxu0 %v102
  %v285 = vpop.f32.mrf.mxu0
  %v286 = vadd.f32 %v65, %v285
  %v287 = vpop.f32.mrf.mxu0
  %288 = vmatprep.mubr.f32.mxu0 0.0
  %289 = vmatmul.mubr.f32.gmra.mxu0 %v105
  %v290 = vpop.f32.mrf.mxu0
  %v291 = vadd.f32 %v65, %v290
  %v292 = vpop.f32.mrf.mxu0
  %293 = vmatprep.mubr.f32.mxu0 0.0
  %294 = vmatmul.mubr.f32.gmra.mxu0 %v108
  %v295 = vpop.f32.mrf.mxu0
  %v296 = vadd.f32 %v65, %v295
  %v297 = vpop.f32.mrf.mxu0
  %298 = vmatprep.mubr.f32.mxu0 0.0
  %299 = vmatmul.mubr.f32.gmra.mxu0 %v111
  %v300 = vpop.f32.mrf.mxu0
  %v301 = vadd.f32 %v65, %v300
  %v302 = vpop.f32.mrf.mxu0
  %303 = vmatprep.mubr.f32.mxu0 0.0
  %304 = vmatmul.mubr.f32.gmra.mxu0 %v114
  %v305 = vpop.f32.mrf.mxu0
  %v306 = vadd.f32 %v65, %v305
  %v307 = vpop.f32.mrf.mxu0
  %308 = vmatprep.mubr.f32.mxu0 0.0
  %309 = vmatmul.mubr.f32.gmra.mxu0 %v117
  %v310 = vpop.f32.mrf.mxu0
  %v311 = vadd.f32 %v65, %v310
  %v312 = vpop.f32.mrf.mxu0
  %313 = vmatprep.mubr.f32.mxu0 0.0
  %314 = vmatmul.mubr.f32.gmra.mxu0 %v120
  %v315 = vpop.f32.mrf.mxu0
  %v316 = vadd.f32 %v65, %v315
  %v317 = vpop.f32.mrf.mxu0
  %318 = vmatprep.mubr.f32.mxu0 0.0
  %319 = vmatmul.mubr.f32.gmra.mxu0 %v123
  %v320 = vpop.f32.mrf.mxu0
  %v321 = vadd.f32 %v65, %v320
  %v322 = vpop.f32.mrf.mxu0
  %323 = vmatprep.mubr.f32.mxu0 0.0
  %324 = vmatmul.mubr.f32.gmra.mxu0 %v126
  %v325 = vpop.f32.mrf.mxu0
  %v326 = vadd.f32 %v65, %v325
  %v327 = vpop.f32.mrf.mxu0
  %328 = vmatprep.mubr.f32.mxu0 0.0
  %329 = vmatmul.mubr.f32.gmra.mxu0 %v129
  %v330 = vpop.f32.mrf.mxu0
  %v331 = vadd.f32 %v65, %v330
  %v332 = vpop.f32.mrf.mxu0
  %333 = vmatprep.mubr.f32.mxu0 0.0
  %334 = vmatmul.mubr.f32.gmra.mxu0 %v132
  %v335 = vpop.f32.mrf.mxu0
  %v336 = vadd.f32 %v65, %v335
  %v337 = vpop.f32.mrf.mxu0
  %338 = vmatprep.mubr.f32.mxu0 0.0
  %339 = vmatmul.mubr.f32.gmra.mxu0 %v135
  %v340 = vpop.f32.mrf.mxu0
  %v341 = vadd.f32 %v65, %v340
  %v342 = vpop.f32.mrf.mxu0
  %343 = vmatprep.mubr.f32.mxu0 0.0
  %344 = vmatmul.mubr.f32.gmra.mxu0 %v138
  %v345 = vpop.f32.mrf.mxu0
  %v346 = vadd.f32 %v65, %v345
  %v347 = vpop.f32.mrf.mxu0
  %348 = vmatprep.mubr.f32.mxu0 0.0
  %349 = vmatmul.mubr.f32.gmra.mxu0 %v141
  %v350 = vpop.f32.mrf.mxu0
  %v351 = vadd.f32 %v65, %v350
  %v352 = vpop.f32.mrf.mxu0
  %353 = vmatprep.mubr.f32.mxu0 0.0
  %354 = vmatmul.mubr.f32.gmra.mxu0 %v144
  %v355 = vpop.f32.mrf.mxu0
  %v356 = vadd.f32 %v65, %v355
  %v357 = vpop.f32.mrf.mxu0
  %358 = vmatprep.mubr.f32.mxu0 0.0
  %359 = vmatmul.mubr.f32.gmra.mxu0 %v147
  %v360 = vpop.f32.mrf.mxu0
  %v361 = vadd.f32 %v65, %v360
  %v362 = vpop.f32.mrf.mxu0
  %363 = vmatprep.mubr.f32.mxu0 0.0
  %364 = vmatmul.mubr.f32.gmra.mxu0 %v150
  %v365 = vpop.f32.mrf.mxu0
  %v366 = vadd.f32 %v65, %v365
  %v367 = vpop.f32.mrf.mxu0
  %368 = vmatprep.mubr.f32.mxu0 0.0
  %369 = vmatmul.mubr.f32.gmra.mxu0 %v153
  %v370 = vpop.f32.mrf.mxu0
  %v371 = vadd.f32 %v65, %v370
  %v372 = vpop.f32.mrf.mxu0
  %373 = vmatprep.mubr.f32.mxu0 0.0
  %374 = vmatmul.mubr.f32.gmra.mxu0 %v156
  %v375 = vpop.f32.mrf.mxu0
  %v376 = vadd.f32 %v65, %v375
  %v377 = vpop.f32.mrf.mxu0
  %378 = vmatprep.mubr.f32.mxu0 0.0
  %379 = vmatmul.mubr.f32.gmra.mxu0 %v159
  %v380 = vpop.f32.mrf.mxu0
  %v381 = vadd.f32 %v65, %v380
  %v382 = vpop.f32.mrf.mxu0
  %383 = vmatprep.mubr.f32.mxu0 0.0
  %384 = vmatmul.mubr.f32.gmra.mxu0 %v162
  %v385 = vpop.f32.mrf.mxu0
  %v386 = vadd.f32 %v65, %v385
  %v387 = vpop.f32.mrf.mxu0
  %388 = vdwg.mxu0
  %v389 = vmax.f32 %v231, 0.0
  %v390 = vmax.f32 %v236, 0.0
  %v391 = vmax.f32 %v241, 0.0
  %v392 = vmax.f32 %v246, 0.0
  %v393 = vmax.f32 %v251, 0.0
  %v394 = vmax.f32 %v256, 0.0
  %v395 = vmax.f32 %v261, 0.0
  %v396 = vmax.f32 %v266, 0.0
  %v397 = vmax.f32 %v271, 0.0
  %v398 = vmax.f32 %v276, 0.0
  %v399 = vmax.f32 %v281, 0.0
  %v400 = vmax.f32 %v286, 0.0
  %v401 = vmax.f32 %v291, 0.0
  %v402 = vmax.f32 %v296, 0.0
  %v403 = vmax.f32 %v301, 0.0
  %v404 = vmax.f32 %v306, 0.0
  %v405 = vmax.f32 %v311, 0.0
  %v406 = vmax.f32 %v316, 0.0
  %v407 = vmax.f32 %v321, 0.0
  %v408 = vmax.f32 %v326, 0.0
  %v409 = vmax.f32 %v331, 0.0
  %v410 = vmax.f32 %v336, 0.0
  %v411 = vmax.f32 %v341, 0.0
  %v412 = vmax.f32 %v346, 0.0
  %v413 = vmax.f32 %v351, 0.0
  %v414 = vmax.f32 %v356, 0.0
  %v415 = vmax.f32 %v361, 0.0
  %v416 = vmax.f32 %v366, 0.0
  %v417 = vmax.f32 %v371, 0.0
  %v418 = vmax.f32 %v376, 0.0
  %v419 = vmax.f32 %v381, 0.0
  %v420 = vmax.f32 %v386, 0.0
  %v421 = vld [vmem:[%s3] sm:$0xff]
  %v422 = vld [vmem:[%s3 + $0x8] sm:$0xff]
  %v423 = vld [vmem:[%s3 + $0x10] sm:$0xff]
  %v424 = vld [vmem:[%s3 + $0x18] sm:$0xff]
  %v425 = vld [vmem:[%s3 + $0x20] sm:$0xff]
  %v426 = vld [vmem:[%s3 + $0x28] sm:$0xff]
  %v427 = vld [vmem:[%s3 + $0x30] sm:$0xff]
  %v428 = vld [vmem:[%s3 + $0x38] sm:$0xff]
  %v429 = vld [vmem:[%s3 + $0x40] sm:$0xff]
  %v430 = vld [vmem:[%s3 + $0x48] sm:$0xff]
  %v431 = vld [vmem:[%s3 + $0x50] sm:$0xff]
  %v432 = vld [vmem:[%s3 + $0x58] sm:$0xff]
  %v433 = vld [vmem:[%s3 + $0x60] sm:$0xff]
  %v434 = vld [vmem:[%s3 + $0x68] sm:$0xff]
  %v435 = vld [vmem:[%s3 + $0x70] sm:$0xff]
  %v436 = vld [vmem:[%s3 + $0x78] sm:$0xff]
  %v437 = vld [vmem:[%s4] sm:$0x1]
  %v439 = vlaneseq
  %v440 = vshrl.u32 %v439, 7
  %v441 = vsub.s32 0, %v440
  %v442 = vrot.slane %v437, %v441
  %444 = vmatprep.subr.mxu0 0.0
  %445 = vmatpush1.msra.mxu0 %v436
  %446 = vmatprep.subr.mxu0 0.0
  %447 = vmatpush1.msra.mxu0 %v435
  %448 = vmatprep.subr.mxu0 0.0
  %449 = vmatpush1.msra.mxu0 %v434
  %450 = vmatprep.subr.mxu0 0.0
  %451 = vmatpush1.msra.mxu0 %v433
  %452 = vmatprep.subr.mxu0 0.0
  %453 = vmatpush1.msra.mxu0 %v432
  %454 = vmatprep.subr.mxu0 0.0
  %455 = vmatpush1.msra.mxu0 %v431
  %456 = vmatprep.subr.mxu0 0.0
  %457 = vmatpush1.msra.mxu0 %v430
  %458 = vmatprep.subr.mxu0 0.0
  %459 = vmatpush1.msra.mxu0 %v429
  %460 = vmatprep.subr.mxu0 0.0
  %461 = vmatpush1.msra.mxu0 %v428
  %462 = vmatprep.subr.mxu0 0.0
  %463 = vmatpush1.msra.mxu0 %v427
  %464 = vmatprep.subr.mxu0 0.0
  %465 = vmatpush1.msra.mxu0 %v426
  %466 = vmatprep.subr.mxu0 0.0
  %467 = vmatpush1.msra.mxu0 %v425
  %468 = vmatprep.subr.mxu0 0.0
  %469 = vmatpush1.msra.mxu0 %v424
  %470 = vmatprep.subr.mxu0 0.0
  %471 = vmatpush1.msra.mxu0 %v423
  %472 = vmatprep.subr.mxu0 0.0
  %473 = vmatpush1.msra.mxu0 %v422
  %474 = vmatprep.subr.mxu0 0.0
  %475 = vmatpush1.msra.mxu0 %v421
  %476 = vmatprep.subr.mxu0 0.0
  %477 = vmatpush2.msra.mxu0 0.0
  %478 = vmatprep.subr.mxu0 0.0
  %479 = vmatpush2.msra.mxu0 0.0
  %480 = vmatprep.subr.mxu0 0.0
  %481 = vmatpush2.msra.mxu0 0.0
  %482 = vmatprep.subr.mxu0 0.0
  %483 = vmatpush2.msra.mxu0 0.0
  %484 = vmatprep.subr.mxu0 0.0
  %485 = vmatpush2.msra.mxu0 0.0
  %486 = vmatprep.subr.mxu0 0.0
  %487 = vmatpush2.msra.mxu0 0.0
  %488 = vmatprep.subr.mxu0 0.0
  %489 = vmatpush2.msra.mxu0 0.0
  %490 = vmatprep.subr.mxu0 0.0
  %491 = vmatpush2.msra.mxu0 0.0
  %492 = vmatprep.subr.mxu0 0.0
  %493 = vmatpush2.msra.mxu0 0.0
  %494 = vmatprep.subr.mxu0 0.0
  %495 = vmatpush2.msra.mxu0 0.0
  %496 = vmatprep.subr.mxu0 0.0
  %497 = vmatpush2.msra.mxu0 0.0
  %498 = vmatprep.subr.mxu0 0.0
  %499 = vmatpush2.msra.mxu0 0.0
  %500 = vmatprep.subr.mxu0 0.0
  %501 = vmatpush2.msra.mxu0 0.0
  %502 = vmatprep.subr.mxu0 0.0
  %503 = vmatpush2.msra.mxu0 0.0
  %504 = vmatprep.subr.mxu0 0.0
  %505 = vmatpush2.msra.mxu0 0.0
  %506 = vmatprep.subr.mxu0 0.0
  %507 = vmatpush2.msra.mxu0 0.0
  %508 = vmatprep.mubr.f32.mxu0 0.0
  %509 = vmatmul.mubr.f32.gmra.mxu0 %v389
  %v510 = vpop.f32.mrf.mxu0
  %v511 = vadd.f32 %v442, %v510
  %v512 = vpop.f32.mrf.mxu0
  %513 = vmatprep.mubr.f32.mxu0 0.0
  %514 = vmatmul.mubr.f32.gmra.mxu0 %v390
  %v515 = vpop.f32.mrf.mxu0
  %v516 = vadd.f32 %v442, %v515
  %v517 = vpop.f32.mrf.mxu0
  %518 = vmatprep.mubr.f32.mxu0 0.0
  %519 = vmatmul.mubr.f32.gmra.mxu0 %v391
  %v520 = vpop.f32.mrf.mxu0
  %v521 = vadd.f32 %v442, %v520
  %v522 = vpop.f32.mrf.mxu0
  %523 = vmatprep.mubr.f32.mxu0 0.0
  %524 = vmatmul.mubr.f32.gmra.mxu0 %v392
  %v525 = vpop.f32.mrf.mxu0
  %v526 = vadd.f32 %v442, %v525
  %v527 = vpop.f32.mrf.mxu0
  %528 = vmatprep.mubr.f32.mxu0 0.0
  %529 = vmatmul.mubr.f32.gmra.mxu0 %v393
  %v530 = vpop.f32.mrf.mxu0
  %v531 = vadd.f32 %v442, %v530
  %v532 = vpop.f32.mrf.mxu0
  %533 = vmatprep.mubr.f32.mxu0 0.0
  %534 = vmatmul.mubr.f32.gmra.mxu0 %v394
  %v535 = vpop.f32.mrf.mxu0
  %v536 = vadd.f32 %v442, %v535
  %v537 = vpop.f32.mrf.mxu0
  %538 = vmatprep.mubr.f32.mxu0 0.0
  %539 = vmatmul.mubr.f32.gmra.mxu0 %v395
  %v540 = vpop.f32.mrf.mxu0
  %v541 = vadd.f32 %v442, %v540
  %v542 = vpop.f32.mrf.mxu0
  %543 = vmatprep.mubr.f32.mxu0 0.0
  %544 = vmatmul.mubr.f32.gmra.mxu0 %v396
  %v545 = vpop.f32.mrf.mxu0
  %v546 = vadd.f32 %v442, %v545
  %v547 = vpop.f32.mrf.mxu0
  %548 = vmatprep.mubr.f32.mxu0 0.0
  %549 = vmatmul.mubr.f32.gmra.mxu0 %v397
  %v550 = vpop.f32.mrf.mxu0
  %v551 = vadd.f32 %v442, %v550
  %v552 = vpop.f32.mrf.mxu0
  %553 = vmatprep.mubr.f32.mxu0 0.0
  %554 = vmatmul.mubr.f32.gmra.mxu0 %v398
  %v555 = vpop.f32.mrf.mxu0
  %v556 = vadd.f32 %v442, %v555
  %v557 = vpop.f32.mrf.mxu0
  %558 = vmatprep.mubr.f32.mxu0 0.0
  %559 = vmatmul.mubr.f32.gmra.mxu0 %v399
  %v560 = vpop.f32.mrf.mxu0
  %v561 = vadd.f32 %v442, %v560
  %v562 = vpop.f32.mrf.mxu0
  %563 = vmatprep.mubr.f32.mxu0 0.0
  %564 = vmatmul.mubr.f32.gmra.mxu0 %v400
  %v565 = vpop.f32.mrf.mxu0
  %v566 = vadd.f32 %v442, %v565
  %v567 = vpop.f32.mrf.mxu0
  %568 = vmatprep.mubr.f32.mxu0 0.0
  %569 = vmatmul.mubr.f32.gmra.mxu0 %v401
  %v570 = vpop.f32.mrf.mxu0
  %v571 = vadd.f32 %v442, %v570
  %v572 = vpop.f32.mrf.mxu0
  %573 = vmatprep.mubr.f32.mxu0 0.0
  %574 = vmatmul.mubr.f32.gmra.mxu0 %v402
  %v575 = vpop.f32.mrf.mxu0
  %v576 = vadd.f32 %v442, %v575
  %v577 = vpop.f32.mrf.mxu0
  %578 = vmatprep.mubr.f32.mxu0 0.0
  %579 = vmatmul.mubr.f32.gmra.mxu0 %v403
  %v580 = vpop.f32.mrf.mxu0
  %v581 = vadd.f32 %v442, %v580
  %v582 = vpop.f32.mrf.mxu0
  %583 = vmatprep.mubr.f32.mxu0 0.0
  %584 = vmatmul.mubr.f32.gmra.mxu0 %v404
  %v585 = vpop.f32.mrf.mxu0
  %v586 = vadd.f32 %v442, %v585
  %v587 = vpop.f32.mrf.mxu0
  %588 = vmatprep.mubr.f32.mxu0 0.0
  %589 = vmatmul.mubr.f32.gmra.mxu0 %v405
  %v590 = vpop.f32.mrf.mxu0
  %v591 = vadd.f32 %v442, %v590
  %v592 = vpop.f32.mrf.mxu0
  %593 = vmatprep.mubr.f32.mxu0 0.0
  %594 = vmatmul.mubr.f32.gmra.mxu0 %v406
  %v595 = vpop.f32.mrf.mxu0
  %v596 = vadd.f32 %v442, %v595
  %v597 = vpop.f32.mrf.mxu0
  %598 = vmatprep.mubr.f32.mxu0 0.0
  %599 = vmatmul.mubr.f32.gmra.mxu0 %v407
  %v600 = vpop.f32.mrf.mxu0
  %v601 = vadd.f32 %v442, %v600
  %v602 = vpop.f32.mrf.mxu0
  %603 = vmatprep.mubr.f32.mxu0 0.0
  %604 = vmatmul.mubr.f32.gmra.mxu0 %v408
  %v605 = vpop.f32.mrf.mxu0
  %v606 = vadd.f32 %v442, %v605
  %v607 = vpop.f32.mrf.mxu0
  %608 = vmatprep.mubr.f32.mxu0 0.0
  %609 = vmatmul.mubr.f32.gmra.mxu0 %v409
  %v610 = vpop.f32.mrf.mxu0
  %v611 = vadd.f32 %v442, %v610
  %v612 = vpop.f32.mrf.mxu0
  %613 = vmatprep.mubr.f32.mxu0 0.0
  %614 = vmatmul.mubr.f32.gmra.mxu0 %v410
  %v615 = vpop.f32.mrf.mxu0
  %v616 = vadd.f32 %v442, %v615
  %v617 = vpop.f32.mrf.mxu0
  %618 = vmatprep.mubr.f32.mxu0 0.0
  %619 = vmatmul.mubr.f32.gmra.mxu0 %v411
  %v620 = vpop.f32.mrf.mxu0
  %v621 = vadd.f32 %v442, %v620
  %v622 = vpop.f32.mrf.mxu0
  %623 = vmatprep.mubr.f32.mxu0 0.0
  %624 = vmatmul.mubr.f32.gmra.mxu0 %v412
  %v625 = vpop.f32.mrf.mxu0
  %v626 = vadd.f32 %v442, %v625
  %v627 = vpop.f32.mrf.mxu0
  %628 = vmatprep.mubr.f32.mxu0 0.0
  %629 = vmatmul.mubr.f32.gmra.mxu0 %v413
  %v630 = vpop.f32.mrf.mxu0
  %v631 = vadd.f32 %v442, %v630
  %v632 = vpop.f32.mrf.mxu0
  %633 = vmatprep.mubr.f32.mxu0 0.0
  %634 = vmatmul.mubr.f32.gmra.mxu0 %v414
  %v635 = vpop.f32.mrf.mxu0
  %v636 = vadd.f32 %v442, %v635
  %v637 = vpop.f32.mrf.mxu0
  %638 = vmatprep.mubr.f32.mxu0 0.0
  %639 = vmatmul.mubr.f32.gmra.mxu0 %v415
  %v640 = vpop.f32.mrf.mxu0
  %v641 = vadd.f32 %v442, %v640
  %v642 = vpop.f32.mrf.mxu0
  %643 = vmatprep.mubr.f32.mxu0 0.0
  %644 = vmatmul.mubr.f32.gmra.mxu0 %v416
  %v645 = vpop.f32.mrf.mxu0
  %v646 = vadd.f32 %v442, %v645
  %v647 = vpop.f32.mrf.mxu0
  %648 = vmatprep.mubr.f32.mxu0 0.0
  %649 = vmatmul.mubr.f32.gmra.mxu0 %v417
  %v650 = vpop.f32.mrf.mxu0
  %v651 = vadd.f32 %v442, %v650
  %v652 = vpop.f32.mrf.mxu0
  %653 = vmatprep.mubr.f32.mxu0 0.0
  %654 = vmatmul.mubr.f32.gmra.mxu0 %v418
  %v655 = vpop.f32.mrf.mxu0
  %v656 = vadd.f32 %v442, %v655
  %v657 = vpop.f32.mrf.mxu0
  %658 = vmatprep.mubr.f32.mxu0 0.0
  %659 = vmatmul.mubr.f32.gmra.mxu0 %v419
  %v660 = vpop.f32.mrf.mxu0
  %v661 = vadd.f32 %v442, %v660
  %v662 = vpop.f32.mrf.mxu0
  %663 = vmatprep.mubr.f32.mxu0 0.0
  %664 = vmatmul.mubr.f32.gmra.mxu0 %v420
  %v665 = vpop.f32.mrf.mxu0
  %v666 = vadd.f32 %v442, %v665
  %v667 = vpop.f32.mrf.mxu0
  %668 = vdwg.mxu0
  %669 = vmax.xlane.f32.xlu0 %v511
  %v670 = vpop.xlane.xlu0 %669
  %671 = vmax.xlane.f32.xlu0 %v516
  %v672 = vpop.xlane.xlu0 %671
  %673 = vmax.xlane.f32.xlu0 %v521
  %v674 = vpop.xlane.xlu0 %673
  %675 = vmax.xlane.f32.xlu0 %v526
  %v676 = vpop.xlane.xlu0 %675
  %677 = vmax.xlane.f32.xlu0 %v531
  %v678 = vpop.xlane.xlu0 %677
  %679 = vmax.xlane.f32.xlu0 %v536
  %v680 = vpop.xlane.xlu0 %679
  %681 = vmax.xlane.f32.xlu0 %v541
  %v682 = vpop.xlane.xlu0 %681
  %683 = vmax.xlane.f32.xlu0 %v546
  %v684 = vpop.xlane.xlu0 %683
  %685 = vmax.xlane.f32.xlu0 %v551
  %v686 = vpop.xlane.xlu0 %685
  %687 = vmax.xlane.f32.xlu0 %v556
  %v688 = vpop.xlane.xlu0 %687
  %689 = vmax.xlane.f32.xlu0 %v561
  %v690 = vpop.xlane.xlu0 %689
  %691 = vmax.xlane.f32.xlu0 %v566
  %v692 = vpop.xlane.xlu0 %691
  %693 = vmax.xlane.f32.xlu0 %v571
  %v694 = vpop.xlane.xlu0 %693
  %695 = vmax.xlane.f32.xlu0 %v576
  %v696 = vpop.xlane.xlu0 %695
  %697 = vmax.xlane.f32.xlu0 %v581
  %v698 = vpop.xlane.xlu0 %697
  %699 = vmax.xlane.f32.xlu0 %v586
  %v700 = vpop.xlane.xlu0 %699
  %701 = vmax.xlane.f32.xlu0 %v591
  %v702 = vpop.xlane.xlu0 %701
  %703 = vmax.xlane.f32.xlu0 %v596
  %v704 = vpop.xlane.xlu0 %703
  %705 = vmax.xlane.f32.xlu0 %v601
  %v706 = vpop.xlane.xlu0 %705
  %707 = vmax.xlane.f32.xlu0 %v606
  %v708 = vpop.xlane.xlu0 %707
  %709 = vmax.xlane.f32.xlu0 %v611
  %v710 = vpop.xlane.xlu0 %709
  %711 = vmax.xlane.f32.xlu0 %v616
  %v712 = vpop.xlane.xlu0 %711
  %713 = vmax.xlane.f32.xlu0 %v621
  %v714 = vpop.xlane.xlu0 %713
  %715 = vmax.xlane.f32.xlu0 %v626
  %v716 = vpop.xlane.xlu0 %715
  %717 = vmax.xlane.f32.xlu0 %v631
  %v718 = vpop.xlane.xlu0 %717
  %719 = vmax.xlane.f32.xlu0 %v636
  %v720 = vpop.xlane.xlu0 %719
  %721 = vmax.xlane.f32.xlu0 %v641
  %v722 = vpop.xlane.xlu0 %721
  %723 = vmax.xlane.f32.xlu0 %v646
  %v724 = vpop.xlane.xlu0 %723
  %725 = vmax.xlane.f32.xlu0 %v651
  %v726 = vpop.xlane.xlu0 %725
  %727 = vmax.xlane.f32.xlu0 %v656
  %v728 = vpop.xlane.xlu0 %727
  %729 = vmax.xlane.f32.xlu0 %v661
  %v730 = vpop.xlane.xlu0 %729
  %731 = vmax.xlane.f32.xlu0 %v666
  %v732 = vpop.xlane.xlu0 %731
  %v733 = vsub.f32 %v511, %v670
  %v734 = vsub.f32 %v516, %v672
  %v735 = vsub.f32 %v521, %v674
  %v736 = vsub.f32 %v526, %v676
  %v737 = vsub.f32 %v531, %v678
  %v738 = vsub.f32 %v536, %v680
  %v739 = vsub.f32 %v541, %v682
  %v740 = vsub.f32 %v546, %v684
  %v741 = vsub.f32 %v551, %v686
  %v742 = vsub.f32 %v556, %v688
  %v743 = vsub.f32 %v561, %v690
  %v744 = vsub.f32 %v566, %v692
  %v745 = vsub.f32 %v571, %v694
  %v746 = vsub.f32 %v576, %v696
  %v747 = vsub.f32 %v581, %v698
  %v748 = vsub.f32 %v586, %v700
  %v749 = vsub.f32 %v591, %v702
  %v750 = vsub.f32 %v596, %v704
  %v751 = vsub.f32 %v601, %v706
  %v752 = vsub.f32 %v606, %v708
  %v753 = vsub.f32 %v611, %v710
  %v754 = vsub.f32 %v616, %v712
  %v755 = vsub.f32 %v621, %v714
  %v756 = vsub.f32 %v626, %v716
  %v757 = vsub.f32 %v631, %v718
  %v758 = vsub.f32 %v636, %v720
  %v759 = vsub.f32 %v641, %v722
  %v760 = vsub.f32 %v646, %v724
  %v761 = vsub.f32 %v651, %v726
  %v762 = vsub.f32 %v656, %v728
  %v763 = vsub.f32 %v661, %v730
  %v764 = vsub.f32 %v666, %v732
  %v765 = vmul.f32 %v733, 1.442695
  %v766 = vpow.pop %v765
  %v767 = vmul.f32 %v734, 1.442695
  %v768 = vpow.pop %v767
  %v769 = vmul.f32 %v735, 1.442695
  %v770 = vpow.pop %v769
  %v771 = vmul.f32 %v736, 1.442695
  %v772 = vpow.pop %v771
  %v773 = vmul.f32 %v737, 1.442695
  %v774 = vpow.pop %v773
  %v775 = vmul.f32 %v738, 1.442695
  %v776 = vpow.pop %v775
  %v777 = vmul.f32 %v739, 1.442695
  %v778 = vpow.pop %v777
  %v779 = vmul.f32 %v740, 1.442695
  %v780 = vpow.pop %v779
  %v781 = vmul.f32 %v741, 1.442695
  %v782 = vpow.pop %v781
  %v783 = vmul.f32 %v742, 1.442695
  %v784 = vpow.pop %v783
  %v785 = vmul.f32 %v743, 1.442695
  %v786 = vpow.pop %v785
  %v787 = vmul.f32 %v744, 1.442695
  %v788 = vpow.pop %v787
  %v789 = vmul.f32 %v745, 1.442695
  %v790 = vpow.pop %v789
  %v791 = vmul.f32 %v746, 1.442695
  %v792 = vpow.pop %v791
  %v793 = vmul.f32 %v747, 1.442695
  %v794 = vpow.pop %v793
  %v795 = vmul.f32 %v748, 1.442695
  %v796 = vpow.pop %v795
  %v797 = vmul.f32 %v749, 1.442695
  %v798 = vpow.pop %v797
  %v799 = vmul.f32 %v750, 1.442695
  %v800 = vpow.pop %v799
  %v801 = vmul.f32 %v751, 1.442695
  %v802 = vpow.pop %v801
  %v803 = vmul.f32 %v752, 1.442695
  %v804 = vpow.pop %v803
  %v805 = vmul.f32 %v753, 1.442695
  %v806 = vpow.pop %v805
  %v807 = vmul.f32 %v754, 1.442695
  %v808 = vpow.pop %v807
  %v809 = vmul.f32 %v755, 1.442695
  %v810 = vpow.pop %v809
  %v811 = vmul.f32 %v756, 1.442695
  %v812 = vpow.pop %v811
  %v813 = vmul.f32 %v757, 1.442695
  %v814 = vpow.pop %v813
  %v815 = vmul.f32 %v758, 1.442695
  %v816 = vpow.pop %v815
  %v817 = vmul.f32 %v759, 1.442695
  %v818 = vpow.pop %v817
  %v819 = vmul.f32 %v760, 1.442695
  %v820 = vpow.pop %v819
  %v821 = vmul.f32 %v761, 1.442695
  %v822 = vpow.pop %v821
  %v823 = vmul.f32 %v762, 1.442695
  %v824 = vpow.pop %v823
  %v825 = vmul.f32 %v763, 1.442695
  %v826 = vpow.pop %v825
  %v827 = vmul.f32 %v764, 1.442695
  %v828 = vpow.pop %v827
  %829 = vadd.xlane.f32.xlu0 %v766
  %v830 = vpop.xlane.xlu0 %829
  %831 = vadd.xlane.f32.xlu0 %v768
  %v832 = vpop.xlane.xlu0 %831
  %833 = vadd.xlane.f32.xlu0 %v770
  %v834 = vpop.xlane.xlu0 %833
  %835 = vadd.xlane.f32.xlu0 %v772
  %v836 = vpop.xlane.xlu0 %835
  %837 = vadd.xlane.f32.xlu0 %v774
  %v838 = vpop.xlane.xlu0 %837
  %839 = vadd.xlane.f32.xlu0 %v776
  %v840 = vpop.xlane.xlu0 %839
  %841 = vadd.xlane.f32.xlu0 %v778
  %v842 = vpop.xlane.xlu0 %841
  %843 = vadd.xlane.f32.xlu0 %v780
  %v844 = vpop.xlane.xlu0 %843
  %845 = vadd.xlane.f32.xlu0 %v782
  %v846 = vpop.xlane.xlu0 %845
  %847 = vadd.xlane.f32.xlu0 %v784
  %v848 = vpop.xlane.xlu0 %847
  %849 = vadd.xlane.f32.xlu0 %v786
  %v850 = vpop.xlane.xlu0 %849
  %851 = vadd.xlane.f32.xlu0 %v788
  %v852 = vpop.xlane.xlu0 %851
  %853 = vadd.xlane.f32.xlu0 %v790
  %v854 = vpop.xlane.xlu0 %853
  %855 = vadd.xlane.f32.xlu0 %v792
  %v856 = vpop.xlane.xlu0 %855
  %857 = vadd.xlane.f32.xlu0 %v794
  %v858 = vpop.xlane.xlu0 %857
  %859 = vadd.xlane.f32.xlu0 %v796
  %v860 = vpop.xlane.xlu0 %859
  %861 = vadd.xlane.f32.xlu0 %v798
  %v862 = vpop.xlane.xlu0 %861
  %863 = vadd.xlane.f32.xlu0 %v800
  %v864 = vpop.xlane.xlu0 %863
  %865 = vadd.xlane.f32.xlu0 %v802
  %v866 = vpop.xlane.xlu0 %865
  %867 = vadd.xlane.f32.xlu0 %v804
  %v868 = vpop.xlane.xlu0 %867
  %869 = vadd.xlane.f32.xlu0 %v806
  %v870 = vpop.xlane.xlu0 %869
  %871 = vadd.xlane.f32.xlu0 %v808
  %v872 = vpop.xlane.xlu0 %871
  %873 = vadd.xlane.f32.xlu0 %v810
  %v874 = vpop.xlane.xlu0 %873
  %875 = vadd.xlane.f32.xlu0 %v812
  %v876 = vpop.xlane.xlu0 %875
  %877 = vadd.xlane.f32.xlu0 %v814
  %v878 = vpop.xlane.xlu0 %877
  %879 = vadd.xlane.f32.xlu0 %v816
  %v880 = vpop.xlane.xlu0 %879
  %881 = vadd.xlane.f32.xlu0 %v818
  %v882 = vpop.xlane.xlu0 %881
  %883 = vadd.xlane.f32.xlu0 %v820
  %v884 = vpop.xlane.xlu0 %883
  %885 = vadd.xlane.f32.xlu0 %v822
  %v886 = vpop.xlane.xlu0 %885
  %887 = vadd.xlane.f32.xlu0 %v824
  %v888 = vpop.xlane.xlu0 %887
  %889 = vadd.xlane.f32.xlu0 %v826
  %v890 = vpop.xlane.xlu0 %889
  %891 = vadd.xlane.f32.xlu0 %v828
  %v892 = vpop.xlane.xlu0 %891
  %v893 = vrcp.pop %v830
  %v894 = vrcp.pop %v832
  %v895 = vrcp.pop %v834
  %v896 = vrcp.pop %v836
  %v897 = vrcp.pop %v838
  %v898 = vrcp.pop %v840
  %v899 = vrcp.pop %v842
  %v900 = vrcp.pop %v844
  %v901 = vrcp.pop %v846
  %v902 = vrcp.pop %v848
  %v903 = vrcp.pop %v850
  %v904 = vrcp.pop %v852
  %v905 = vrcp.pop %v854
  %v906 = vrcp.pop %v856
  %v907 = vrcp.pop %v858
  %v908 = vrcp.pop %v860
  %v909 = vrcp.pop %v862
  %v910 = vrcp.pop %v864
  %v911 = vrcp.pop %v866
  %v912 = vrcp.pop %v868
  %v913 = vrcp.pop %v870
  %v914 = vrcp.pop %v872
  %v915 = vrcp.pop %v874
  %v916 = vrcp.pop %v876
  %v917 = vrcp.pop %v878
  %v918 = vrcp.pop %v880
  %v919 = vrcp.pop %v882
  %v920 = vrcp.pop %v884
  %v921 = vrcp.pop %v886
  %v922 = vrcp.pop %v888
  %v923 = vrcp.pop %v890
  %v924 = vrcp.pop %v892
  %v925 = vmul.f32 %v766, %v893
  %v926 = vmul.f32 %v768, %v894
  %v927 = vmul.f32 %v770, %v895
  %v928 = vmul.f32 %v772, %v896
  %v929 = vmul.f32 %v774, %v897
  %v930 = vmul.f32 %v776, %v898
  %v931 = vmul.f32 %v778, %v899
  %v932 = vmul.f32 %v780, %v900
  %v933 = vmul.f32 %v782, %v901
  %v934 = vmul.f32 %v784, %v902
  %v935 = vmul.f32 %v786, %v903
  %v936 = vmul.f32 %v788, %v904
  %v937 = vmul.f32 %v790, %v905
  %v938 = vmul.f32 %v792, %v906
  %v939 = vmul.f32 %v794, %v907
  %v940 = vmul.f32 %v796, %v908
  %v941 = vmul.f32 %v798, %v909
  %v942 = vmul.f32 %v800, %v910
  %v943 = vmul.f32 %v802, %v911
  %v944 = vmul.f32 %v804, %v912
  %v945 = vmul.f32 %v806, %v913
  %v946 = vmul.f32 %v808, %v914
  %v947 = vmul.f32 %v810, %v915
  %v948 = vmul.f32 %v812, %v916
  %v949 = vmul.f32 %v814, %v917
  %v950 = vmul.f32 %v816, %v918
  %v951 = vmul.f32 %v818, %v919
  %v952 = vmul.f32 %v820, %v920
  %v953 = vmul.f32 %v822, %v921
  %v954 = vmul.f32 %v824, %v922
  %v955 = vmul.f32 %v826, %v923
  %v956 = vmul.f32 %v828, %v924
  %957 = vst [vmem:[%s5] sm:$0xff] %v925
  %958 = vst [vmem:[%s5 + $0x8] sm:$0xff] %v926
  %959 = vst [vmem:[%s5 + $0x10] sm:$0xff] %v927
  %960 = vst [vmem:[%s5 + $0x18] sm:$0xff] %v928
  %961 = vst [vmem:[%s5 + $0x20] sm:$0xff] %v929
  %962 = vst [vmem:[%s5 + $0x28] sm:$0xff] %v930
  %963 = vst [vmem:[%s5 + $0x30] sm:$0xff] %v931
  %964 = vst [vmem:[%s5 + $0x38] sm:$0xff] %v932
  %965 = vst [vmem:[%s5 + $0x40] sm:$0xff] %v933
  %966 = vst [vmem:[%s5 + $0x48] sm:$0xff] %v934
  %967 = vst [vmem:[%s5 + $0x50] sm:$0xff] %v935
  %968 = vst [vmem:[%s5 + $0x58] sm:$0xff] %v936
  %969 = vst [vmem:[%s5 + $0x60] sm:$0xff] %v937
  %970 = vst [vmem:[%s5 + $0x68] sm:$0xff] %v938
  %971 = vst [vmem:[%s5 + $0x70] sm:$0xff] %v939
  %972 = vst [vmem:[%s5 + $0x78] sm:$0xff] %v940
  %973 = vst [vmem:[%s5 + $0x80] sm:$0xff] %v941
  %974 = vst [vmem:[%s5 + $0x88] sm:$0xff] %v942
  %975 = vst [vmem:[%s5 + $0x90] sm:$0xff] %v943
  %976 = vst [vmem:[%s5 + $0x98] sm:$0xff] %v944
  %977 = vst [vmem:[%s5 + $0xa0] sm:$0xff] %v945
  %978 = vst [vmem:[%s5 + $0xa8] sm:$0xff] %v946
  %979 = vst [vmem:[%s5 + $0xb0] sm:$0xff] %v947
  %980 = vst [vmem:[%s5 + $0xb8] sm:$0xff] %v948
  %981 = vst [vmem:[%s5 + $0xc0] sm:$0xff] %v949
  %982 = vst [vmem:[%s5 + $0xc8] sm:$0xff] %v950
  %983 = vst [vmem:[%s5 + $0xd0] sm:$0xff] %v951
  %984 = vst [vmem:[%s5 + $0xd8] sm:$0xff] %v952
  %985 = vst [vmem:[%s5 + $0xe0] sm:$0xff] %v953
  %986 = vst [vmem:[%s5 + $0xe8] sm:$0xff] %v954
  %987 = vst [vmem:[%s5 + $0xf0] sm:$0xff] %v955
  %988 = vst [vmem:[%s5 + $0xf8] sm:$0xff] %v956
  // Predicated region
  $region22: #{baseline_model_forward.1} parent=0 // pred_check
    _
  $region23: #{baseline_model_forward.1} parent=0 // pred_check_branch
    %990 = sbr.rel (0) target = $region25
  $region24: #{baseline_model_forward.1} parent=0 // pred_region
    _
  $region25: #{baseline_model_forward.1} parent=0 // pred_fallthru
    _
  // Predicated region
  $region26: #{baseline_model_forward.1} parent=0 // pred_check
    _
  $region27: #{baseline_model_forward.1} parent=0 // pred_check_branch
    %992 = sbr.rel (0) target = $region29
  $region28: #{baseline_model_forward.1} parent=0 // pred_region
    _
  $region29: #{baseline_model_forward.1} parent=0 // pred_fallthru
    _

</llo_original>
